<compile_context>
chip_gen: v7x
topology: tpu7x:2x2x1
jax: 0.10.0
libtpu: 0.0.40
codegen_flags: <defaults>
</compile_context>

<pallas_src>
import math
import functools

import jax
import jax.numpy as jnp
from jax.experimental import pallas as pl
from jax.experimental.pallas import tpu as pltpu


def _round_up(x, m):
    return ((x + m - 1) // m) * m


def _logprob_kernel(q_ref, k_ref, w_ref, mask_ref, out_ref, *,
                    tanh_clip, apply_mask, compute_dtype):
    q = q_ref[...]          # (bb, query_dim), compute dtype (pre-cast in wrapper)
    w = w_ref[...]          # (query_dim, key_dim), pre-scaled fused weight
    kt = k_ref[...]         # (key_dim, n_pad), key^T, resident

    # Fused projection: (query @ M), f32 accumulation on the MXU.
    qm = jnp.dot(q, w, preferred_element_type=jnp.float32)         # (bb, key_dim)
    qm = qm.astype(compute_dtype)

    # scores = (query @ M) @ key^T as a plain NN matmul (key already transposed).
    scores = jnp.dot(qm, kt, preferred_element_type=jnp.float32)   # (bb, n_pad)

    if tanh_clip > 0.0:
        scores = tanh_clip * jnp.tanh(scores)

    if apply_mask:
        # Precomputed additive mask: 0 on valid key columns, -1e30 on padding.
        scores = scores + mask_ref[...]

    if tanh_clip > 0.0:
        # Scores are bounded in [-tanh_clip, tanh_clip] (padded cols ~ -1e30):
        # exp cannot overflow, so skip the row-max subtraction entirely.
        e = jnp.exp(scores)
    else:
        m = jnp.max(scores, axis=-1, keepdims=True)
        e = jnp.exp(scores - m)

    denom = jnp.sum(e, axis=-1, keepdims=True)
    probs = e * pl.reciprocal(denom, approx=True)
    out_ref[...] = probs.astype(out_ref.dtype)


def fuse_weights(wq, wk, *, key_dim):
    """One-time weight fusion (amortizes to zero across calls).

    wq: (query_dim, key_dim) = torch Wq^T, wk: (key_dim, key_dim) = torch Wk^T.
    Returns M = (Wq^T @ Wk) / sqrt(key_dim) = (wq @ wk^T) / sqrt(key_dim), so
    that scores = (query @ M) @ key^T match the reference (pre-tanh) logits.
    """
    return (jnp.dot(wq, wk.T) / math.sqrt(key_dim)).astype(jnp.float32)


def logprob_forward(query, key, fused_w, *, tanh_clip, block_b=256,
                    matmul_dtype=jnp.bfloat16, out_dtype=jnp.float32):
    """query: (B, query_dim), key: (N, key_dim), fused_w: (query_dim, key_dim).
    Returns probs (B, N) in `out_dtype` (rows sum to ~1 over keys)."""
    B, query_dim = query.shape
    N, key_dim = key.shape
    assert fused_w.shape == (query_dim, key_dim)

    # Lane-dense output columns; sublane-aligned batch (16 for bf16 packing).
    align_b = 8 * max(1, 4 // jnp.dtype(matmul_dtype).itemsize)
    n_pad = _round_up(max(N, 1), 128)
    b_min = _round_up(max(B, 1), align_b)

    bb = _round_up(min(block_b, b_min), align_b)
    # Make sure the (parallel) B grid has >= 2 steps when the batch allows, so
    # both v7x TensorCores get work.  No-op on single-TC v5e/v6e.
    if b_min > align_b and b_min <= bb:
        bb = _round_up((b_min + 1) // 2, align_b)
    b_pad = _round_up(b_min, bb)
    grid = (b_pad // bb,)

    # One-time wrapper-side pad / transpose / cast (cheap XLA ops).
    q_p = query
    if b_pad != B:
        q_p = jnp.pad(q_p, ((0, b_pad - B), (0, 0)))
    q_p = q_p.astype(matmul_dtype)

    k_t = jnp.transpose(key)                       # (key_dim, N)
    if n_pad != N:
        k_t = jnp.pad(k_t, ((0, 0), (0, n_pad - N)))
    k_t = k_t.astype(matmul_dtype)

    w_p = fused_w.astype(matmul_dtype)

    # Additive column mask: 0 for valid keys, -1e30 for padded columns.
    col = jnp.arange(n_pad, dtype=jnp.int32)[None, :]
    mask = jnp.where(col < N, 0.0, -1e30).astype(jnp.float32)

    kernel = functools.partial(
        _logprob_kernel,
        tanh_clip=float(tanh_clip),
        apply_mask=(n_pad != N),
        compute_dtype=matmul_dtype)

    # VMEM budget: conservatively assume 2 buffers everywhere + f32 temporaries;
    # clamp to [32 MiB, 64 MiB] so it is valid on v5e/v6e/v7x.
    dsize = jnp.dtype(matmul_dtype).itemsize
    osize = jnp.dtype(out_dtype).itemsize
    est = (2 * bb * query_dim * dsize          # query blocks
           + 2 * key_dim * n_pad * dsize       # key^T
           + 2 * query_dim * key_dim * dsize   # fused W
           + 2 * n_pad * 4                     # mask
           + 2 * bb * n_pad * osize            # output blocks
           + 4 * bb * n_pad * 4                # f32 temporaries (scores/e/probs)
           + bb * key_dim * 4                  # qm
           + (4 << 20))                        # headroom
    vmem_limit = int(min(max(est, 32 << 20), 64 << 20))

    def make_call(single_buffer_resident):
        def resident(shape):
            if single_buffer_resident:
                # Constant index_map => block is fetched once; a second pipeline
                # buffer would only waste VMEM.
                return pl.BlockSpec(shape, lambda i: (0, 0),
                                    pipeline_mode=pl.Buffered(1))
            return pl.BlockSpec(shape, lambda i: (0, 0))

        return pl.pallas_call(
            kernel,
            out_shape=jax.ShapeDtypeStruct((b_pad, n_pad), out_dtype),
            grid=grid,
            in_specs=[
                pl.BlockSpec((bb, query_dim), lambda i: (i, 0)),  # query: tiled over B
                resident((key_dim, n_pad)),                       # key^T: resident
                resident((query_dim, key_dim)),                   # fused W: resident
                resident((1, n_pad)),                             # column mask: resident
            ],
            out_specs=pl.BlockSpec((bb, n_pad), lambda i: (i, 0)),
            compiler_params=pltpu.CompilerParams(
                dimension_semantics=("parallel",),   # megacore split over B (v7x)
                vmem_limit_bytes=vmem_limit),
        )

    try:
        out = make_call(True)(q_p, k_t, w_p, mask)
        out = jax.block_until_ready(out)
    except Exception:
        # pl.Buffered(1) not accepted on this JAX build -> default double buffering.
        out = make_call(False)(q_p, k_t, w_p, mask)

    return out[:B, :N]


def logprob_reference(query, key, wq, wk, *, tanh_clip):
    """Pure-JAX f32 reference matching the PyTorch module."""
    key_dim = key.shape[1]
    q = query @ wq
    k = key @ wk
    u = (k @ q.T) / math.sqrt(key_dim)
    if tanh_clip > 0:
        u = tanh_clip * jnp.tanh(u)
    return jax.nn.softmax(u.T, axis=1)


def _torch_linear_init(rng, in_features, out_features):
    # Deterministic stand-in for nn.Linear default init (uniform +/- 1/sqrt(in)).
    # Stored as (in, out) = transposed torch weight, so x @ w == torch x @ W^T.
    bound = 1.0 / math.sqrt(in_features)
    return jax.random.uniform(rng, (in_features, out_features),
                              minval=-bound, maxval=bound, dtype=jnp.float32)


if __name__ == "__main__":
    query_dim = 32
    key_dim = 32
    tanh_clip = 10.0
    B = 8      # number of queries
    N = 16     # number of keys

    root = jax.random.PRNGKey(0)
    k_q, k_k, k_wq, k_wk = jax.random.split(root, 4)

    query = jax.random.normal(k_q, (B, query_dim), dtype=jnp.float32)
    key = jax.random.normal(k_k, (N, key_dim), dtype=jnp.float32)
    wq = _torch_linear_init(k_wq, query_dim, key_dim)
    wk = _torch_linear_init(k_wk, key_dim, key_dim)

    fused_w = fuse_weights(wq, wk, key_dim=key_dim)
    ref = logprob_reference(query, key, wq, wk, tanh_clip=tanh_clip)

    # f32 matmul path: tight agreement with the reference.
    probs_f32 = logprob_forward(query, key, fused_w, tanh_clip=tanh_clip,
                                matmul_dtype=jnp.float32)
    probs_f32 = jax.block_until_ready(probs_f32)

    # bf16 matmul path (v6e/v7x MXU fast path): loose agreement.
    probs_bf16 = logprob_forward(query, key, fused_w, tanh_clip=tanh_clip,
                                 matmul_dtype=jnp.bfloat16)
    probs_bf16 = jax.block_until_ready(probs_bf16)

    assert probs_f32.shape == (B, N)
    assert probs_bf16.shape == (B, N)

    # Rows are valid probability distributions (approx reciprocal => ~1e-3 tol).
    assert bool(jnp.all(jnp.abs(jnp.sum(probs_f32, axis=-1) - 1.0) < 5e-3))
    assert bool(jnp.all(jnp.abs(jnp.sum(probs_bf16, axis=-1) - 1.0) < 5e-3))

    # Match the reference.
    assert bool(jnp.max(jnp.abs(probs_f32 - ref)) < 2e-3)
    assert bool(jnp.max(jnp.abs(probs_bf16 - ref)) < 5e-2)

    print("KERNEL_OK")
</pallas_src>

<mosaic_0001>
module attributes {stable_mosaic.version = 11 : i64} {
  func.func @_logprob_kernel(%arg0: i32, %arg1: memref<8x32xf32, #tpu.memory_space<vmem>>, %arg2: memref<32x128xf32, #tpu.memory_space<vmem>>, %arg3: memref<32x32xf32, #tpu.memory_space<vmem>>, %arg4: memref<1x128xf32, #tpu.memory_space<vmem>>, %arg5: memref<8x128xf32, #tpu.memory_space<vmem>>) attributes {dimension_semantics = [#tpu.dimension_semantics<parallel>], iteration_bounds = array<i64: 1>, scalar_prefetch = 0 : i64, scratch_operands = 0 : i64, tpu.core_type = #tpu.core_type<tc>, window_params = [{transform_indices = @transform_0, window_bounds = array<i64: 8, 32>}, {pipeline_mode = #tpu.pipeline_mode<synchronous>, transform_indices = @transform_1, window_bounds = array<i64: 32, 128>}, {pipeline_mode = #tpu.pipeline_mode<synchronous>, transform_indices = @transform_2, window_bounds = array<i64: 32, 32>}, {pipeline_mode = #tpu.pipeline_mode<synchronous>, transform_indices = @transform_3, window_bounds = array<i64: 1, 128>}, {transform_indices = @transform_4, window_bounds = array<i64: 8, 128>}]} {
    %c0 = arith.constant 0 : index
    %c0_0 = arith.constant 0 : index
    %0 = vector.load %arg1[%c0, %c0_0] : memref<8x32xf32, #tpu.memory_space<vmem>>, vector<8x32xf32>
    %c0_1 = arith.constant 0 : index
    %c0_2 = arith.constant 0 : index
    %1 = vector.load %arg3[%c0_1, %c0_2] : memref<32x32xf32, #tpu.memory_space<vmem>>, vector<32x32xf32>
    %c0_3 = arith.constant 0 : index
    %c0_4 = arith.constant 0 : index
    %2 = vector.load %arg2[%c0_3, %c0_4] : memref<32x128xf32, #tpu.memory_space<vmem>>, vector<32x128xf32>
    %cst = arith.constant dense<0.000000e+00> : vector<8x32xf32>
    %3 = tpu.matmul %0, %1, %cst {dimension_numbers = #tpu.dot_dimension_numbers<[1], [0], [0], [1], [0, 0, 1, 1], [], []>} : vector<8x32xf32>, vector<32x32xf32>, vector<8x32xf32> -> vector<8x32xf32>
    %cst_5 = arith.constant dense<0.000000e+00> : vector<8x128xf32>
    %4 = tpu.matmul %3, %2, %cst_5 {dimension_numbers = #tpu.dot_dimension_numbers<[1], [0], [0], [1], [0, 0, 1, 1], [], []>} : vector<8x32xf32>, vector<32x128xf32>, vector<8x128xf32> -> vector<8x128xf32>
    %5 = math.tanh %4 : vector<8x128xf32>
    %cst_6 = arith.constant 1.000000e+01 : f32
    %6 = vector.broadcast %cst_6 : f32 to vector<8x128xf32>
    %7 = arith.mulf %6, %5 : vector<8x128xf32>
    %c0_7 = arith.constant 0 : index
    %c0_8 = arith.constant 0 : index
    %8 = vector.load %arg4[%c0_7, %c0_8] : memref<1x128xf32, #tpu.memory_space<vmem>>, vector<1x128xf32>
    %9 = vector.broadcast %8 : vector<1x128xf32> to vector<8x128xf32>
    %10 = arith.addf %7, %9 : vector<8x128xf32>
    %11 = math.exp %10 : vector<8x128xf32>
    %cst_9 = arith.constant dense<0.000000e+00> : vector<8xf32>
    %12 = vector.multi_reduction <add>, %11, %cst_9 [1] : vector<8x128xf32> to vector<8xf32>
    %13 = vector.shape_cast %12 : vector<8xf32> to vector<8x1xf32>
    %14 = tpu.reciprocal %13 {approx = true} : vector<8x1xf32> -> vector<8x1xf32>
    %15 = vector.broadcast %14 : vector<8x1xf32> to vector<8x128xf32>
    %16 = arith.mulf %11, %15 : vector<8x128xf32>
    %c0_10 = arith.constant 0 : index
    %c0_11 = arith.constant 0 : index
    %17 = vector.load %arg5[%c0_10, %c0_11] : memref<8x128xf32, #tpu.memory_space<vmem>>, vector<8x128xf32>
    tpu.vector_store %arg5[%c0_10, %c0_11], %16 {strides = array<i32>} : memref<8x128xf32, #tpu.memory_space<vmem>>, vector<8x128xf32>,
    return
  }
  func.func @transform_0(%arg0: i32) -> (i32, i32) {
    %c0_i32 = arith.constant 0 : i32
    %c0_i32_0 = arith.constant 0 : i32
    return %arg0, %c0_i32 : i32, i32
  }
  func.func @transform_1(%arg0: i32) -> (i32, i32) {
    %c0_i32 = arith.constant 0 : i32
    %c0_i32_0 = arith.constant 0 : i32
    %c0_i32_1 = arith.constant 0 : i32
    return %c0_i32, %c0_i32_0 : i32, i32
  }
  func.func @transform_2(%arg0: i32) -> (i32, i32) {
    %c0_i32 = arith.constant 0 : i32
    %c0_i32_0 = arith.constant 0 : i32
    %c0_i32_1 = arith.constant 0 : i32
    return %c0_i32, %c0_i32_0 : i32, i32
  }
  func.func @transform_3(%arg0: i32) -> (i32, i32) {
    %c0_i32 = arith.constant 0 : i32
    %c0_i32_0 = arith.constant 0 : i32
    %c0_i32_1 = arith.constant 0 : i32
    return %c0_i32, %c0_i32_0 : i32, i32
  }
  func.func @transform_4(%arg0: i32) -> (i32, i32) {
    %c0_i32 = arith.constant 0 : i32
    %c0_i32_0 = arith.constant 0 : i32
    return %arg0, %c0_i32 : i32, i32
  }
}

module attributes {stable_mosaic.version = 11 : i64} {
  func.func @_logprob_kernel(%arg0: i32, %arg1: memref<8x32xf32, #tpu.memory_space<vmem>>, %arg2: memref<32x128xf32, #tpu.memory_space<vmem>>, %arg3: memref<32x32xf32, #tpu.memory_space<vmem>>, %arg4: memref<1x128xf32, #tpu.memory_space<vmem>>, %arg5: memref<8x128xf32, #tpu.memory_space<vmem>>) attributes {dimension_semantics = [#tpu.dimension_semantics<parallel>], iteration_bounds = array<i64: 1>, scalar_prefetch = 0 : i64, scratch_operands = 0 : i64, tpu.core_type = #tpu.core_type<tc>, window_params = [{transform_indices = @transform_0, window_bounds = array<i64: 8, 32>}, {pipeline_mode = #tpu.pipeline_mode<synchronous>, transform_indices = @transform_1, window_bounds = array<i64: 32, 128>}, {pipeline_mode = #tpu.pipeline_mode<synchronous>, transform_indices = @transform_2, window_bounds = array<i64: 32, 32>}, {pipeline_mode = #tpu.pipeline_mode<synchronous>, transform_indices = @transform_3, window_bounds = array<i64: 1, 128>}, {transform_indices = @transform_4, window_bounds = array<i64: 8, 128>}]} {
    %c0 = arith.constant 0 : index
    %c0_0 = arith.constant 0 : index
    %0 = vector.load %arg1[%c0, %c0_0] : memref<8x32xf32, #tpu.memory_space<vmem>>, vector<8x32xf32>
    %c0_1 = arith.constant 0 : index
    %c0_2 = arith.constant 0 : index
    %1 = vector.load %arg3[%c0_1, %c0_2] : memref<32x32xf32, #tpu.memory_space<vmem>>, vector<32x32xf32>
    %c0_3 = arith.constant 0 : index
    %c0_4 = arith.constant 0 : index
    %2 = vector.load %arg2[%c0_3, %c0_4] : memref<32x128xf32, #tpu.memory_space<vmem>>, vector<32x128xf32>
    %cst = arith.constant dense<0.000000e+00> : vector<8x32xf32>
    %3 = tpu.matmul %0, %1, %cst {dimension_numbers = #tpu.dot_dimension_numbers<[1], [0], [0], [1], [0, 0, 1, 1], [], []>} : vector<8x32xf32>, vector<32x32xf32>, vector<8x32xf32> -> vector<8x32xf32>
    %cst_5 = arith.constant dense<0.000000e+00> : vector<8x128xf32>
    %4 = tpu.matmul %3, %2, %cst_5 {dimension_numbers = #tpu.dot_dimension_numbers<[1], [0], [0], [1], [0, 0, 1, 1], [], []>} : vector<8x32xf32>, vector<32x128xf32>, vector<8x128xf32> -> vector<8x128xf32>
    %5 = math.tanh %4 : vector<8x128xf32>
    %cst_6 = arith.constant 1.000000e+01 : f32
    %6 = vector.broadcast %cst_6 : f32 to vector<8x128xf32>
    %7 = arith.mulf %6, %5 : vector<8x128xf32>
    %c0_7 = arith.constant 0 : index
    %c0_8 = arith.constant 0 : index
    %8 = vector.load %arg4[%c0_7, %c0_8] : memref<1x128xf32, #tpu.memory_space<vmem>>, vector<1x128xf32>
    %9 = vector.broadcast %8 : vector<1x128xf32> to vector<8x128xf32>
    %10 = arith.addf %7, %9 : vector<8x128xf32>
    %11 = math.exp %10 : vector<8x128xf32>
    %cst_9 = arith.constant dense<0.000000e+00> : vector<8xf32>
    %12 = vector.multi_reduction <add>, %11, %cst_9 [1] : vector<8x128xf32> to vector<8xf32>
    %13 = vector.shape_cast %12 : vector<8xf32> to vector<8x1xf32>
    %14 = tpu.reciprocal %13 {approx = true} : vector<8x1xf32> -> vector<8x1xf32>
    %15 = vector.broadcast %14 : vector<8x1xf32> to vector<8x128xf32>
    %16 = arith.mulf %11, %15 : vector<8x128xf32>
    %c0_10 = arith.constant 0 : index
    %c0_11 = arith.constant 0 : index
    %17 = vector.load %arg5[%c0_10, %c0_11] : memref<8x128xf32, #tpu.memory_space<vmem>>, vector<8x128xf32>
    tpu.vector_store %arg5[%c0_10, %c0_11], %16 {strides = array<i32>} : memref<8x128xf32, #tpu.memory_space<vmem>>, vector<8x128xf32>,
    return
  }
  func.func @transform_0(%arg0: i32) -> (i32, i32) {
    %c0_i32 = arith.constant 0 : i32
    %c0_i32_0 = arith.constant 0 : i32
    return %arg0, %c0_i32 : i32, i32
  }
  func.func @transform_1(%arg0: i32) -> (i32, i32) {
    %c0_i32 = arith.constant 0 : i32
    %c0_i32_0 = arith.constant 0 : i32
    %c0_i32_1 = arith.constant 0 : i32
    return %c0_i32, %c0_i32_0 : i32, i32
  }
  func.func @transform_2(%arg0: i32) -> (i32, i32) {
    %c0_i32 = arith.constant 0 : i32
    %c0_i32_0 = arith.constant 0 : i32
    %c0_i32_1 = arith.constant 0 : i32
    return %c0_i32, %c0_i32_0 : i32, i32
  }
  func.func @transform_3(%arg0: i32) -> (i32, i32) {
    %c0_i32 = arith.constant 0 : i32
    %c0_i32_0 = arith.constant 0 : i32
    %c0_i32_1 = arith.constant 0 : i32
    return %c0_i32, %c0_i32_0 : i32, i32
  }
  func.func @transform_4(%arg0: i32) -> (i32, i32) {
    %c0_i32 = arith.constant 0 : i32
    %c0_i32_0 = arith.constant 0 : i32
    return %arg0, %c0_i32 : i32, i32
  }
}

</mosaic_0001>

<llo_original>
// kernel: tpu_custom_call.1
$region0: #{tpu_custom_call.1}
  #allocation0 [shape = 'u32[]', space=smem, size = 0x4, offset = 0x4, fixed_abs, tag = 'smem constant byte address 0x4 - core index']
  #allocation1 [shape = 'u32[144,128]{1,0:T(1,128)}', space=vmem, size = 0x12000, scoped, tag = 'internal scratch']
  %s0 = inlined_call_operand.hbm [shape: f32[8,32], index: 0, kind: input, shape index: {}]
  %s1 = inlined_call_operand.hbm [shape: f32[32,128], index: 1, kind: input, shape index: {}]
  %s2 = inlined_call_operand.hbm [shape: f32[32,32], index: 2, kind: input, shape index: {}]
  %s3 = inlined_call_operand.vmem [shape: f32[1,128], index: 3, kind: input, shape index: {}]
  %s4 = inlined_call_operand.hbm [shape: f32[8,128], index: 4, kind: output, shape index: {}]
  %s5 = sld [smem:[#allocation0]]
  $region38: #{tpu_custom_call.1} parent=0
    _
  %s7 = ssub.s32 1, %s5
  %s8 = scalar_select 0, %s7, %s5
  $region1: #{tpu_custom_call.1} parent=0
    #allocation2 [shape = 'u8[4096]{0}', space=vmem, size = 0x1000, scoped, tag = 'input window, operand 0, single buffered']
    #allocation3 [shape = 's32[1]{0}', space=sflag, size = 0x4, scoped, tag = 'scoped memory for tpu_custom_call.1']
    #allocation4 [shape = 's32[1]{0}', space=sflag, size = 0x4, scoped, tag = 'scoped memory for tpu_custom_call.1']
    #allocation5 [shape = 'u8[16384]{0}', space=vmem, size = 0x4000, scoped, tag = 'input window, operand 1, single buffered']
    #allocation6 [shape = 's32[1]{0}', space=sflag, size = 0x4, scoped, tag = 'scoped memory for tpu_custom_call.1']
    #allocation7 [shape = 'u8[16384]{0}', space=vmem, size = 0x4000, scoped, tag = 'input window, operand 2, single buffered']
    #allocation8 [shape = 'u8[4096]{0}', space=vmem, size = 0x1000, scoped, tag = 'output window, operand 0, single buffered']
    %9 = vsyncpa [#allocation3], 0
    %10 = vsyncpa [#allocation6], 0
    %11 = vsyncpa [#allocation4], 0
    // Predicated region
    $region2: #{tpu_custom_call.1} parent=1 // pred_check
      _
    $region3: #{tpu_custom_call.1} parent=1 // pred_check_branch
      %13 = sbr.rel (0) target = $region5
    $region4: #{tpu_custom_call.1} parent=1 // pred_region
      %s15 = ssub.s32 128, 128
      %16 = vsyncadd [#allocation3], %s15
      %s18 = sshll.u32 [#allocation2], 4
      %s19 = int_to_ptr.vmem [resolvable:$true] %s18
      %21 = dma.hbm_to_vmem [thread:$0]  %s0, 128, %s19, [#allocation3]
    $region5: #{tpu_custom_call.1} parent=1 // pred_fallthru
      _
    // Predicated region
    $region6: #{tpu_custom_call.1} parent=1 // pred_check
      _
    $region7: #{tpu_custom_call.1} parent=1 // pred_check_branch
      %23 = sbr.rel (0) target = $region9
    $region8: #{tpu_custom_call.1} parent=1 // pred_region
      %s25 = ssub.s32 512, 512
      %26 = vsyncadd [#allocation6], %s25
      %s27 = sshll.u32 [#allocation5], 4
      %s28 = int_to_ptr.vmem [resolvable:$true] %s27
      %33 = dma.hbm_to_vmem [thread:$0]  %s1, 512, %s28, [#allocation6], 128, 128, 8
    $region9: #{tpu_custom_call.1} parent=1 // pred_fallthru
      _
    // Predicated region
    $region10: #{tpu_custom_call.1} parent=1 // pred_check
      _
    $region11: #{tpu_custom_call.1} parent=1 // pred_check_branch
      %35 = sbr.rel (0) target = $region13
    $region12: #{tpu_custom_call.1} parent=1 // pred_region
      %s37 = ssub.s32 512, 512
      %38 = vsyncadd [#allocation6], %s37
      %s39 = sshll.u32 [#allocation7], 4
      %s40 = int_to_ptr.vmem [resolvable:$true] %s39
      %45 = dma.hbm_to_vmem [thread:$0]  %s2, 512, %s40, [#allocation6], 128, 128, 8
    $region13: #{tpu_custom_call.1} parent=1 // pred_fallthru
      _
    // Predicated region
    $region14: #{tpu_custom_call.1} parent=1 // pred_check
      _
    $region15: #{tpu_custom_call.1} parent=1 // pred_check_branch
      %47 = sbr.rel (0) target = $region17
    $region16: #{tpu_custom_call.1} parent=1 // pred_region
      _
    $region17: #{tpu_custom_call.1} parent=1 // pred_fallthru
      _
    // Predicated region
    $region18: #{tpu_custom_call.1} parent=1 // pred_check
      _
    $region19: #{tpu_custom_call.1} parent=1 // pred_check_branch
      %49 = sbr.rel (0) target = $region21
    $region20: #{tpu_custom_call.1} parent=1 // pred_region
      %50 = dma.done [#allocation3], 128
    $region21: #{tpu_custom_call.1} parent=1 // pred_fallthru
      _
    // Predicated region
    $region22: #{tpu_custom_call.1} parent=1 // pred_check
      _
    $region23: #{tpu_custom_call.1} parent=1 // pred_check_branch
      %52 = sbr.rel (0) target = $region25
    $region24: #{tpu_custom_call.1} parent=1 // pred_region
      %53 = dma.done [#allocation6], 512
    $region25: #{tpu_custom_call.1} parent=1 // pred_fallthru
      _
    // Predicated region
    $region26: #{tpu_custom_call.1} parent=1 // pred_check
      _
    $region27: #{tpu_custom_call.1} parent=1 // pred_check_branch
      %55 = sbr.rel (0) target = $region29
    $region28: #{tpu_custom_call.1} parent=1 // pred_region
      %56 = dma.done [#allocation6], 512
    $region29: #{tpu_custom_call.1} parent=1 // pred_fallthru
      _
    %v57 = vld [vmem:[#allocation2] sm:$0xff]
    %v58 = vld [vmem:[#allocation7] sm:$0xff]
    %v59 = vld [vmem:[#allocation7 + $0x8] sm:$0xff]
    %v60 = vld [vmem:[#allocation7 + $0x10] sm:$0xff]
    %v61 = vld [vmem:[#allocation7 + $0x18] sm:$0xff]
    %v62 = vld [vmem:[#allocation5] sm:$0xff]
    %v63 = vld [vmem:[#allocation5 + $0x8] sm:$0xff]
    %v64 = vld [vmem:[#allocation5 + $0x10] sm:$0xff]
    %v65 = vld [vmem:[#allocation5 + $0x18] sm:$0xff]
    %vm66 = vcmask 261120
    %v68 = vsel %vm66, %v57, 0
    %70 = vmatprep.subr.mxu0 0.0
    %71 = vmatpush1.msra.mxu0 %v58
    %72 = vmatprep.subr.mxu0 0.0
    %73 = vmatpush1.msra.mxu0 %v59
    %74 = vmatprep.subr.mxu0 0.0
    %75 = vmatpush1.msra.mxu0 %v60
    %76 = vmatprep.subr.mxu0 0.0
    %77 = vmatpush1.msra.mxu0 %v61
    %78 = vmatprep.subr.mxu0 0.0
    %79 = vmatpush1.msra.mxu0 0.0
    %80 = vmatprep.subr.mxu0 0.0
    %81 = vmatpush1.msra.mxu0 0.0
    %82 = vmatprep.subr.mxu0 0.0
    %83 = vmatpush1.msra.mxu0 0.0
    %84 = vmatprep.subr.mxu0 0.0
    %85 = vmatpush1.msra.mxu0 0.0
    %86 = vmatprep.subr.mxu0 0.0
    %87 = vmatpush1.msra.mxu0 0.0
    %88 = vmatprep.subr.mxu0 0.0
    %89 = vmatpush1.msra.mxu0 0.0
    %90 = vmatprep.subr.mxu0 0.0
    %91 = vmatpush1.msra.mxu0 0.0
    %92 = vmatprep.subr.mxu0 0.0
    %93 = vmatpush1.msra.mxu0 0.0
    %94 = vmatprep.subr.mxu0 0.0
    %95 = vmatpush1.msra.mxu0 0.0
    %96 = vmatprep.subr.mxu0 0.0
    %97 = vmatpush1.msra.mxu0 0.0
    %98 = vmatprep.subr.mxu0 0.0
    %99 = vmatpush1.msra.mxu0 0.0
    %100 = vmatprep.subr.mxu0 0.0
    %101 = vmatpush1.msra.mxu0 0.0
    %102 = vmatprep.subr.mxu0 0.0
    %103 = vmatpush1.msra.mxu0 0.0
    %104 = vmatprep.subr.mxu0 0.0
    %105 = vmatpush1.msra.mxu0 0.0
    %106 = vmatprep.subr.mxu0 0.0
    %107 = vmatpush1.msra.mxu0 0.0
    %108 = vmatprep.subr.mxu0 0.0
    %109 = vmatpush1.msra.mxu0 0.0
    %110 = vmatprep.subr.mxu0 0.0
    %111 = vmatpush1.msra.mxu0 0.0
    %112 = vmatprep.subr.mxu0 0.0
    %113 = vmatpush1.msra.mxu0 0.0
    %114 = vmatprep.subr.mxu0 0.0
    %115 = vmatpush1.msra.mxu0 0.0
    %116 = vmatprep.subr.mxu0 0.0
    %117 = vmatpush1.msra.mxu0 0.0
    %118 = vmatprep.subr.mxu0 0.0
    %119 = vmatpush1.msra.mxu0 0.0
    %120 = vmatprep.subr.mxu0 0.0
    %121 = vmatpush1.msra.mxu0 0.0
    %122 = vmatprep.subr.mxu0 0.0
    %123 = vmatpush1.msra.mxu0 0.0
    %124 = vmatprep.subr.mxu0 0.0
    %125 = vmatpush1.msra.mxu0 0.0
    %126 = vmatprep.subr.mxu0 0.0
    %127 = vmatpush1.msra.mxu0 0.0
    %128 = vmatprep.subr.mxu0 0.0
    %129 = vmatpush1.msra.mxu0 0.0
    %130 = vmatprep.subr.mxu0 0.0
    %131 = vmatpush1.msra.mxu0 0.0
    %132 = vmatprep.subr.mxu0 0.0
    %133 = vmatpush1.msra.mxu0 0.0
    %134 = vmatprep.mubr.f32.mxu0 0.0
    %135 = vmatmul.mubr.f32.gmra.mrb[0].mxu0 %v68
    %v136 = vpop.f32.mrb[0].mxu0
    %v137 = vadd.f32 0.0, %v136
    %v138 = vpop.f32.mrb[0].mxu0
    %139 = vdwg.mxu0
    %v141 = vsel %vm66, %v137, 0
    %143 = vmatprep.subr.mxu0 0.0
    %144 = vmatpush1.msra.mxu0 %v62
    %145 = vmatprep.subr.mxu0 0.0
    %146 = vmatpush1.msra.mxu0 %v63
    %147 = vmatprep.subr.mxu0 0.0
    %148 = vmatpush1.msra.mxu0 %v64
    %149 = vmatprep.subr.mxu0 0.0
    %150 = vmatpush1.msra.mxu0 %v65
    %151 = vmatprep.subr.mxu0 0.0
    %152 = vmatpush1.msra.mxu0 0.0
    %153 = vmatprep.subr.mxu0 0.0
    %154 = vmatpush1.msra.mxu0 0.0
    %155 = vmatprep.subr.mxu0 0.0
    %156 = vmatpush1.msra.mxu0 0.0
    %157 = vmatprep.subr.mxu0 0.0
    %158 = vmatpush1.msra.mxu0 0.0
    %159 = vmatprep.subr.mxu0 0.0
    %160 = vmatpush1.msra.mxu0 0.0
    %161 = vmatprep.subr.mxu0 0.0
    %162 = vmatpush1.msra.mxu0 0.0
    %163 = vmatprep.subr.mxu0 0.0
    %164 = vmatpush1.msra.mxu0 0.0
    %165 = vmatprep.subr.mxu0 0.0
    %166 = vmatpush1.msra.mxu0 0.0
    %167 = vmatprep.subr.mxu0 0.0
    %168 = vmatpush1.msra.mxu0 0.0
    %169 = vmatprep.subr.mxu0 0.0
    %170 = vmatpush1.msra.mxu0 0.0
    %171 = vmatprep.subr.mxu0 0.0
    %172 = vmatpush1.msra.mxu0 0.0
    %173 = vmatprep.subr.mxu0 0.0
    %174 = vmatpush1.msra.mxu0 0.0
    %175 = vmatprep.subr.mxu0 0.0
    %176 = vmatpush1.msra.mxu0 0.0
    %177 = vmatprep.subr.mxu0 0.0
    %178 = vmatpush1.msra.mxu0 0.0
    %179 = vmatprep.subr.mxu0 0.0
    %180 = vmatpush1.msra.mxu0 0.0
    %181 = vmatprep.subr.mxu0 0.0
    %182 = vmatpush1.msra.mxu0 0.0
    %183 = vmatprep.subr.mxu0 0.0
    %184 = vmatpush1.msra.mxu0 0.0
    %185 = vmatprep.subr.mxu0 0.0
    %186 = vmatpush1.msra.mxu0 0.0
    %187 = vmatprep.subr.mxu0 0.0
    %188 = vmatpush1.msra.mxu0 0.0
    %189 = vmatprep.subr.mxu0 0.0
    %190 = vmatpush1.msra.mxu0 0.0
    %191 = vmatprep.subr.mxu0 0.0
    %192 = vmatpush1.msra.mxu0 0.0
    %193 = vmatprep.subr.mxu0 0.0
    %194 = vmatpush1.msra.mxu0 0.0
    %195 = vmatprep.subr.mxu0 0.0
    %196 = vmatpush1.msra.mxu0 0.0
    %197 = vmatprep.subr.mxu0 0.0
    %198 = vmatpush1.msra.mxu0 0.0
    %199 = vmatprep.subr.mxu0 0.0
    %200 = vmatpush1.msra.mxu0 0.0
    %201 = vmatprep.subr.mxu0 0.0
    %202 = vmatpush1.msra.mxu0 0.0
    %203 = vmatprep.subr.mxu0 0.0
    %204 = vmatpush1.msra.mxu0 0.0
    %205 = vmatprep.subr.mxu0 0.0
    %206 = vmatpush1.msra.mxu0 0.0
    %207 = vmatprep.mubr.f32.mxu0 0.0
    %208 = vmatmul.mubr.f32.gmra.mrb[0].mxu0 %v141
    %v209 = vpop.f32.mrb[0].mxu0
    %v210 = vadd.f32 0.0, %v209
    %v211 = vpop.f32.mrb[0].mxu0
    %212 = vdwg.mxu0
    %v213 = vtanh.pop %v210
    %v214 = vmul.f32 %v213, 10.0
    %v215 = vld [vmem:[%s3] sm:$0x1]
    %v217 = vlaneseq
    %v218 = vshrl.u32 %v217, 7
    %v219 = vsub.s32 0, %v218
    %v220 = vrot.slane %v215, %v219
    %v222 = vadd.f32 %v214, %v220
    %v223 = vmul.f32 %v222, 1.442695
    %v224 = vpow.pop %v223
    %225 = vadd.xlane.f32.xlu0 %v224
    %v226 = vpop.xlane.xlu0 %225
    %v227 = vrcp.pop %v226
    %v228 = vmul.f32 %v224, %v227
    %229 = vst [vmem:[#allocation8] sm:$0xff] %v228
    // Predicated region
    $region30: #{tpu_custom_call.1} parent=1 // pred_check
      _
    $region31: #{tpu_custom_call.1} parent=1 // pred_check_branch
      %231 = sbr.rel (0) target = $region33
    $region32: #{tpu_custom_call.1} parent=1 // pred_region
      %s233 = ssub.s32 128, 128
      %234 = vsyncadd [#allocation4], %s233
      %s236 = sshll.u32 [#allocation8], 4
      %s237 = int_to_ptr.vmem [resolvable:$true] %s236
      %239 = dma.vmem_to_hbm [thread:$0]  %s237, 128, %s4, [#allocation4]
    $region33: #{tpu_custom_call.1} parent=1 // pred_fallthru
      _
    // Predicated region
    $region34: #{tpu_custom_call.1} parent=1 // pred_check
      _
    $region35: #{tpu_custom_call.1} parent=1 // pred_check_branch
      %241 = sbr.rel (0) target = $region37
    $region36: #{tpu_custom_call.1} parent=1 // pred_region
      %242 = dma.done [#allocation4], 128
    $region37: #{tpu_custom_call.1} parent=1 // pred_fallthru
      _
    %243 = vsyncpa [#allocation3], 1
    %244 = vsyncpa [#allocation6], 1
    %245 = vsyncpa [#allocation4], 1

// kernel: tpu_custom_call.1
$region0: #{tpu_custom_call.1}
  #allocation0 [shape = 'u32[]', space=smem, size = 0x4, offset = 0x4, fixed_abs, tag = 'smem constant byte address 0x4 - core index']
  #allocation1 [shape = 'u32[144,128]{1,0:T(1,128)}', space=vmem, size = 0x12000, scoped, tag = 'internal scratch']
  %s0 = inlined_call_operand.hbm [shape: f32[8,32], index: 0, kind: input, shape index: {}]
  %s1 = inlined_call_operand.hbm [shape: f32[32,128], index: 1, kind: input, shape index: {}]
  %s2 = inlined_call_operand.hbm [shape: f32[32,32], index: 2, kind: input, shape index: {}]
  %s3 = inlined_call_operand.vmem [shape: f32[1,128], index: 3, kind: input, shape index: {}]
  %s4 = inlined_call_operand.hbm [shape: f32[8,128], index: 4, kind: output, shape index: {}]
  %s5 = sld [smem:[#allocation0]]
  $region38: #{tpu_custom_call.1} parent=0
    _
  %s7 = ssub.s32 1, %s5
  %s8 = scalar_select 0, %s7, %s5
  $region1: #{tpu_custom_call.1} parent=0
    #allocation2 [shape = 'u8[4096]{0}', space=vmem, size = 0x1000, scoped, tag = 'input window, operand 0, single buffered']
    #allocation3 [shape = 's32[1]{0}', space=sflag, size = 0x4, scoped, tag = 'scoped memory for tpu_custom_call.1']
    #allocation4 [shape = 's32[1]{0}', space=sflag, size = 0x4, scoped, tag = 'scoped memory for tpu_custom_call.1']
    #allocation5 [shape = 'u8[16384]{0}', space=vmem, size = 0x4000, scoped, tag = 'input window, operand 1, single buffered']
    #allocation6 [shape = 's32[1]{0}', space=sflag, size = 0x4, scoped, tag = 'scoped memory for tpu_custom_call.1']
    #allocation7 [shape = 'u8[16384]{0}', space=vmem, size = 0x4000, scoped, tag = 'input window, operand 2, single buffered']
    #allocation8 [shape = 'u8[4096]{0}', space=vmem, size = 0x1000, scoped, tag = 'output window, operand 0, single buffered']
    %9 = vsyncpa [#allocation3], 0
    %10 = vsyncpa [#allocation6], 0
    %11 = vsyncpa [#allocation4], 0
    // Predicated region
    $region2: #{tpu_custom_call.1} parent=1 // pred_check
      _
    $region3: #{tpu_custom_call.1} parent=1 // pred_check_branch
      %13 = sbr.rel (0) target = $region5
    $region4: #{tpu_custom_call.1} parent=1 // pred_region
      %s15 = ssub.s32 128, 128
      %16 = vsyncadd [#allocation3], %s15
      %s18 = sshll.u32 [#allocation2], 4
      %s19 = int_to_ptr.vmem [resolvable:$true] %s18
      %21 = dma.hbm_to_vmem [thread:$0]  %s0, 128, %s19, [#allocation3]
    $region5: #{tpu_custom_call.1} parent=1 // pred_fallthru
      _
    // Predicated region
    $region6: #{tpu_custom_call.1} parent=1 // pred_check
      _
    $region7: #{tpu_custom_call.1} parent=1 // pred_check_branch
      %23 = sbr.rel (0) target = $region9
    $region8: #{tpu_custom_call.1} parent=1 // pred_region
      %s25 = ssub.s32 512, 512
      %26 = vsyncadd [#allocation6], %s25
      %s27 = sshll.u32 [#allocation5], 4
      %s28 = int_to_ptr.vmem [resolvable:$true] %s27
      %33 = dma.hbm_to_vmem [thread:$0]  %s1, 512, %s28, [#allocation6], 128, 128, 8
    $region9: #{tpu_custom_call.1} parent=1 // pred_fallthru
      _
    // Predicated region
    $region10: #{tpu_custom_call.1} parent=1 // pred_check
      _
    $region11: #{tpu_custom_call.1} parent=1 // pred_check_branch
      %35 = sbr.rel (0) target = $region13
    $region12: #{tpu_custom_call.1} parent=1 // pred_region
      %s37 = ssub.s32 512, 512
      %38 = vsyncadd [#allocation6], %s37
      %s39 = sshll.u32 [#allocation7], 4
      %s40 = int_to_ptr.vmem [resolvable:$true] %s39
      %45 = dma.hbm_to_vmem [thread:$0]  %s2, 512, %s40, [#allocation6], 128, 128, 8
    $region13: #{tpu_custom_call.1} parent=1 // pred_fallthru
      _
    // Predicated region
    $region14: #{tpu_custom_call.1} parent=1 // pred_check
      _
    $region15: #{tpu_custom_call.1} parent=1 // pred_check_branch
      %47 = sbr.rel (0) target = $region17
    $region16: #{tpu_custom_call.1} parent=1 // pred_region
      _
    $region17: #{tpu_custom_call.1} parent=1 // pred_fallthru
      _
    // Predicated region
    $region18: #{tpu_custom_call.1} parent=1 // pred_check
      _
    $region19: #{tpu_custom_call.1} parent=1 // pred_check_branch
      %49 = sbr.rel (0) target = $region21
    $region20: #{tpu_custom_call.1} parent=1 // pred_region
      %50 = dma.done [#allocation3], 128
    $region21: #{tpu_custom_call.1} parent=1 // pred_fallthru
      _
    // Predicated region
    $region22: #{tpu_custom_call.1} parent=1 // pred_check
      _
    $region23: #{tpu_custom_call.1} parent=1 // pred_check_branch
      %52 = sbr.rel (0) target = $region25
    $region24: #{tpu_custom_call.1} parent=1 // pred_region
      %53 = dma.done [#allocation6], 512
    $region25: #{tpu_custom_call.1} parent=1 // pred_fallthru
      _
    // Predicated region
    $region26: #{tpu_custom_call.1} parent=1 // pred_check
      _
    $region27: #{tpu_custom_call.1} parent=1 // pred_check_branch
      %55 = sbr.rel (0) target = $region29
    $region28: #{tpu_custom_call.1} parent=1 // pred_region
      %56 = dma.done [#allocation6], 512
    $region29: #{tpu_custom_call.1} parent=1 // pred_fallthru
      _
    %v57 = vld [vmem:[#allocation2] sm:$0xff]
    %v58 = vld [vmem:[#allocation7] sm:$0xff]
    %v59 = vld [vmem:[#allocation7 + $0x8] sm:$0xff]
    %v60 = vld [vmem:[#allocation7 + $0x10] sm:$0xff]
    %v61 = vld [vmem:[#allocation7 + $0x18] sm:$0xff]
    %v62 = vld [vmem:[#allocation5] sm:$0xff]
    %v63 = vld [vmem:[#allocation5 + $0x8] sm:$0xff]
    %v64 = vld [vmem:[#allocation5 + $0x10] sm:$0xff]
    %v65 = vld [vmem:[#allocation5 + $0x18] sm:$0xff]
    %vm66 = vcmask 261120
    %v68 = vsel %vm66, %v57, 0
    %70 = vmatprep.subr.mxu0 0.0
    %71 = vmatpush1.msra.mxu0 %v58
    %72 = vmatprep.subr.mxu0 0.0
    %73 = vmatpush1.msra.mxu0 %v59
    %74 = vmatprep.subr.mxu0 0.0
    %75 = vmatpush1.msra.mxu0 %v60
    %76 = vmatprep.subr.mxu0 0.0
    %77 = vmatpush1.msra.mxu0 %v61
    %78 = vmatprep.subr.mxu0 0.0
    %79 = vmatpush1.msra.mxu0 0.0
    %80 = vmatprep.subr.mxu0 0.0
    %81 = vmatpush1.msra.mxu0 0.0
    %82 = vmatprep.subr.mxu0 0.0
    %83 = vmatpush1.msra.mxu0 0.0
    %84 = vmatprep.subr.mxu0 0.0
    %85 = vmatpush1.msra.mxu0 0.0
    %86 = vmatprep.subr.mxu0 0.0
    %87 = vmatpush1.msra.mxu0 0.0
    %88 = vmatprep.subr.mxu0 0.0
    %89 = vmatpush1.msra.mxu0 0.0
    %90 = vmatprep.subr.mxu0 0.0
    %91 = vmatpush1.msra.mxu0 0.0
    %92 = vmatprep.subr.mxu0 0.0
    %93 = vmatpush1.msra.mxu0 0.0
    %94 = vmatprep.subr.mxu0 0.0
    %95 = vmatpush1.msra.mxu0 0.0
    %96 = vmatprep.subr.mxu0 0.0
    %97 = vmatpush1.msra.mxu0 0.0
    %98 = vmatprep.subr.mxu0 0.0
    %99 = vmatpush1.msra.mxu0 0.0
    %100 = vmatprep.subr.mxu0 0.0
    %101 = vmatpush1.msra.mxu0 0.0
    %102 = vmatprep.subr.mxu0 0.0
    %103 = vmatpush1.msra.mxu0 0.0
    %104 = vmatprep.subr.mxu0 0.0
    %105 = vmatpush1.msra.mxu0 0.0
    %106 = vmatprep.subr.mxu0 0.0
    %107 = vmatpush1.msra.mxu0 0.0
    %108 = vmatprep.subr.mxu0 0.0
    %109 = vmatpush1.msra.mxu0 0.0
    %110 = vmatprep.subr.mxu0 0.0
    %111 = vmatpush1.msra.mxu0 0.0
    %112 = vmatprep.subr.mxu0 0.0
    %113 = vmatpush1.msra.mxu0 0.0
    %114 = vmatprep.subr.mxu0 0.0
    %115 = vmatpush1.msra.mxu0 0.0
    %116 = vmatprep.subr.mxu0 0.0
    %117 = vmatpush1.msra.mxu0 0.0
    %118 = vmatprep.subr.mxu0 0.0
    %119 = vmatpush1.msra.mxu0 0.0
    %120 = vmatprep.subr.mxu0 0.0
    %121 = vmatpush1.msra.mxu0 0.0
    %122 = vmatprep.subr.mxu0 0.0
    %123 = vmatpush1.msra.mxu0 0.0
    %124 = vmatprep.subr.mxu0 0.0
    %125 = vmatpush1.msra.mxu0 0.0
    %126 = vmatprep.subr.mxu0 0.0
    %127 = vmatpush1.msra.mxu0 0.0
    %128 = vmatprep.subr.mxu0 0.0
    %129 = vmatpush1.msra.mxu0 0.0
    %130 = vmatprep.subr.mxu0 0.0
    %131 = vmatpush1.msra.mxu0 0.0
    %132 = vmatprep.subr.mxu0 0.0
    %133 = vmatpush1.msra.mxu0 0.0
    %134 = vmatprep.mubr.f32.mxu0 0.0
    %135 = vmatmul.mubr.f32.gmra.mrb[0].mxu0 %v68
    %v136 = vpop.f32.mrb[0].mxu0
    %v137 = vadd.f32 0.0, %v136
    %v138 = vpop.f32.mrb[0].mxu0
    %139 = vdwg.mxu0
    %v141 = vsel %vm66, %v137, 0
    %143 = vmatprep.subr.mxu0 0.0
    %144 = vmatpush1.msra.mxu0 %v62
    %145 = vmatprep.subr.mxu0 0.0
    %146 = vmatpush1.msra.mxu0 %v63
    %147 = vmatprep.subr.mxu0 0.0
    %148 = vmatpush1.msra.mxu0 %v64
    %149 = vmatprep.subr.mxu0 0.0
    %150 = vmatpush1.msra.mxu0 %v65
    %151 = vmatprep.subr.mxu0 0.0
    %152 = vmatpush1.msra.mxu0 0.0
    %153 = vmatprep.subr.mxu0 0.0
    %154 = vmatpush1.msra.mxu0 0.0
    %155 = vmatprep.subr.mxu0 0.0
    %156 = vmatpush1.msra.mxu0 0.0
    %157 = vmatprep.subr.mxu0 0.0
    %158 = vmatpush1.msra.mxu0 0.0
    %159 = vmatprep.subr.mxu0 0.0
    %160 = vmatpush1.msra.mxu0 0.0
    %161 = vmatprep.subr.mxu0 0.0
    %162 = vmatpush1.msra.mxu0 0.0
    %163 = vmatprep.subr.mxu0 0.0
    %164 = vmatpush1.msra.mxu0 0.0
    %165 = vmatprep.subr.mxu0 0.0
    %166 = vmatpush1.msra.mxu0 0.0
    %167 = vmatprep.subr.mxu0 0.0
    %168 = vmatpush1.msra.mxu0 0.0
    %169 = vmatprep.subr.mxu0 0.0
    %170 = vmatpush1.msra.mxu0 0.0
    %171 = vmatprep.subr.mxu0 0.0
    %172 = vmatpush1.msra.mxu0 0.0
    %173 = vmatprep.subr.mxu0 0.0
    %174 = vmatpush1.msra.mxu0 0.0
    %175 = vmatprep.subr.mxu0 0.0
    %176 = vmatpush1.msra.mxu0 0.0
    %177 = vmatprep.subr.mxu0 0.0
    %178 = vmatpush1.msra.mxu0 0.0
    %179 = vmatprep.subr.mxu0 0.0
    %180 = vmatpush1.msra.mxu0 0.0
    %181 = vmatprep.subr.mxu0 0.0
    %182 = vmatpush1.msra.mxu0 0.0
    %183 = vmatprep.subr.mxu0 0.0
    %184 = vmatpush1.msra.mxu0 0.0
    %185 = vmatprep.subr.mxu0 0.0
    %186 = vmatpush1.msra.mxu0 0.0
    %187 = vmatprep.subr.mxu0 0.0
    %188 = vmatpush1.msra.mxu0 0.0
    %189 = vmatprep.subr.mxu0 0.0
    %190 = vmatpush1.msra.mxu0 0.0
    %191 = vmatprep.subr.mxu0 0.0
    %192 = vmatpush1.msra.mxu0 0.0
    %193 = vmatprep.subr.mxu0 0.0
    %194 = vmatpush1.msra.mxu0 0.0
    %195 = vmatprep.subr.mxu0 0.0
    %196 = vmatpush1.msra.mxu0 0.0
    %197 = vmatprep.subr.mxu0 0.0
    %198 = vmatpush1.msra.mxu0 0.0
    %199 = vmatprep.subr.mxu0 0.0
    %200 = vmatpush1.msra.mxu0 0.0
    %201 = vmatprep.subr.mxu0 0.0
    %202 = vmatpush1.msra.mxu0 0.0
    %203 = vmatprep.subr.mxu0 0.0
    %204 = vmatpush1.msra.mxu0 0.0
    %205 = vmatprep.subr.mxu0 0.0
    %206 = vmatpush1.msra.mxu0 0.0
    %207 = vmatprep.mubr.f32.mxu0 0.0
    %208 = vmatmul.mubr.f32.gmra.mrb[0].mxu0 %v141
    %v209 = vpop.f32.mrb[0].mxu0
    %v210 = vadd.f32 0.0, %v209
    %v211 = vpop.f32.mrb[0].mxu0
    %212 = vdwg.mxu0
    %v213 = vtanh.pop %v210
    %v214 = vmul.f32 %v213, 10.0
    %v215 = vld [vmem:[%s3] sm:$0x1]
    %v217 = vlaneseq
    %v218 = vshrl.u32 %v217, 7
    %v219 = vsub.s32 0, %v218
    %v220 = vrot.slane %v215, %v219
    %v222 = vadd.f32 %v214, %v220
    %v223 = vmul.f32 %v222, 1.442695
    %v224 = vpow.pop %v223
    %225 = vadd.xlane.f32.xlu0 %v224
    %v226 = vpop.xlane.xlu0 %225
    %v227 = vrcp.pop %v226
    %v228 = vmul.f32 %v224, %v227
    %229 = vst [vmem:[#allocation8] sm:$0xff] %v228
    // Predicated region
    $region30: #{tpu_custom_call.1} parent=1 // pred_check
      _
    $region31: #{tpu_custom_call.1} parent=1 // pred_check_branch
      %231 = sbr.rel (0) target = $region33
    $region32: #{tpu_custom_call.1} parent=1 // pred_region
      %s233 = ssub.s32 128, 128
      %234 = vsyncadd [#allocation4], %s233
      %s236 = sshll.u32 [#allocation8], 4
      %s237 = int_to_ptr.vmem [resolvable:$true] %s236
      %239 = dma.vmem_to_hbm [thread:$0]  %s237, 128, %s4, [#allocation4]
    $region33: #{tpu_custom_call.1} parent=1 // pred_fallthru
      _
    // Predicated region
    $region34: #{tpu_custom_call.1} parent=1 // pred_check
      _
    $region35: #{tpu_custom_call.1} parent=1 // pred_check_branch
      %241 = sbr.rel (0) target = $region37
    $region36: #{tpu_custom_call.1} parent=1 // pred_region
      %242 = dma.done [#allocation4], 128
    $region37: #{tpu_custom_call.1} parent=1 // pred_fallthru
      _
    %243 = vsyncpa [#allocation3], 1
    %244 = vsyncpa [#allocation6], 1
    %245 = vsyncpa [#allocation4], 1

</llo_original>
